<compile_context>
chip_gen: v5e
topology: v5e:2x2
jax: 0.10.0
libtpu: 0.0.40
codegen_flags: <defaults>
</compile_context>

<pallas_src>
import functools

import jax
import jax.numpy as jnp
from jax import lax
from jax.experimental import pallas as pl
from jax.experimental.pallas import tpu as pltpu

LANE = 128


def _round_up(v, m):
    return ((v + m - 1) // m) * m


def _onehot_gather_kernel(idx_ref, x_ref, o_ref):
    """Gather-as-matmul: o = onehot(idx) @ x, one full tile per grid step.

    idx_ref: (block_rows, 1) int32 in VMEM
    x_ref:   (n1, d_tile) features, VMEM-resident
    o_ref:   (block_rows, d_tile) output tile

    Rows whose index is negative, >= n1, or the shadow sentinel (== n1) have an
    all-zero one-hot row and therefore come out exactly zero.
    NOTE: assumes finite features (0 * inf = nan inside the matmul reduction);
    route through the grouped path (onehot_max_n1=0) if features may be non-finite.
    """
    idx = idx_ref[...]                                           # (block_rows, 1)
    n1 = x_ref.shape[0]
    cols = lax.broadcasted_iota(jnp.int32, (idx.shape[0], n1), 1)
    onehot = jnp.where(cols == idx, 1.0, 0.0).astype(x_ref.dtype)
    o_ref[...] = jnp.dot(onehot, x_ref[...],
                         preferred_element_type=jnp.float32).astype(o_ref.dtype)


def _grouped_gather_kernel(idx_ref, x_ref, o_ref, *, n1, group):
    """Fallback for large n1: gather `group` rows into a register tile, then
    issue ONE dense (group, d_tile) store instead of `group` masked row stores.

    idx_ref: (block_rows,) int32 in SMEM (blocked operand)
    x_ref:   (n1, d_tile) features, VMEM-resident
    o_ref:   (block_rows, d_tile) output tile
    """
    block_rows, d_tile = o_ref.shape
    zero_row = jnp.zeros((1, d_tile), dtype=o_ref.dtype)

    def body(g, carry):
        base = pl.multiple_of(g * group, group)
        rows = []
        for r in range(group):                                   # static unroll
            idx = idx_ref[base + r]                              # SMEM scalar read
            safe = jnp.clip(idx, 0, n1 - 1)                      # clamp both sides
            row = x_ref[safe, :][None, :]                        # (1, d_tile)
            idx_vec = jnp.full((1, d_tile), idx, dtype=jnp.int32)
            keep = jnp.logical_and(idx_vec >= 0, idx_vec < n1)
            rows.append(jnp.where(keep, row, zero_row))          # exact zeros
        o_ref[pl.ds(base, group), :] = jnp.concatenate(rows, axis=0)
        return carry

    lax.fori_loop(0, block_rows // group, body, 0)


def _maybe_single_buffered(block_shape, index_map):
    # x's block index is constant within a column slab, so double-buffering it
    # only wastes VMEM.  Fall back silently on jax versions without pipeline_mode.
    try:
        return pl.BlockSpec(block_shape, index_map, pipeline_mode=pl.Buffered(1))
    except Exception:
        return pl.BlockSpec(block_shape, index_map)


def nearest_upsample(x, inds, *, block_rows_max=512, onehot_max_n1=2048,
                     target_steps=8, interpret=False):
    """Pallas implementation of closest_pool(x, inds).

    x:    [n1, d] float features
    inds: [n2, max_num] int neighbor indices (only column 0 used);
          value n1 addresses the shadow zero row.
    returns: [n2, d]
    """
    n1, d = x.shape
    n2 = inds.shape[0]
    dtype = x.dtype
    itemsize = jnp.dtype(dtype).itemsize
    sublane = max(8, 32 // itemsize)          # 8 f32 / 16 bf16 / 32 int8 tile rows

    # Row blocking: dtype-aligned, large enough to amortize per-step overhead,
    # small enough that megacore parts get several steps per TensorCore.
    block_rows = min(block_rows_max,
                     _round_up(pl.cdiv(n2, target_steps), sublane))
    block_rows = max(sublane, min(block_rows, _round_up(n2, sublane)))
    n_blocks = pl.cdiv(n2, block_rows)
    n_pad = n_blocks * block_rows

    # VMEM budget (v7x has 64 MiB/TC vs 128 MiB on v5e/v6e).
    try:
        vmem_cap = int(pltpu.get_tpu_info().vmem_capacity_bytes)
    except Exception:
        vmem_cap = 64 << 20                   # conservative (v7x) default
    vmem_budget = int(vmem_cap * 0.85)

    # Feature-dim (column) tiling keeps x VMEM-resident even when n1*d would
    # overflow the budget; each column slab is DMA'd once (outer grid axis).
    slab_budget = int(vmem_budget * 0.6)
    if n1 * d * itemsize <= slab_budget or d < 2 * LANE:
        d_tile, d_blocks = d, 1
        # TODO(synk): if n1*d still exceeds VMEM here (huge n1 with narrow d),
        # fall back to x in HBM (memory_space=pl.ANY) with async-copy gathers.
    else:
        cols = max(LANE, (slab_budget // (n1 * itemsize)) // LANE * LANE)
        d_tile = int(min(cols, (d // LANE) * LANE))
        d_blocks = pl.cdiv(d, d_tile)

    # Indices: only column 0 is used; pad to whole row blocks with the shadow
    # sentinel so every in-kernel index is well defined (tail rows are dropped
    # by the partial-block writeback anyway).
    idx0 = inds[:, 0].astype(jnp.int32)
    if n_pad != n2:
        idx0 = jnp.pad(idx0, (0, n_pad - n2), constant_values=n1)

    use_onehot = n1 <= onehot_max_n1
    if use_onehot:
        idx_arr = idx0[:, None]                                   # (n_pad, 1) VMEM
        idx_spec = pl.BlockSpec((block_rows, 1), lambda j, i: (i, 0))
        kernel = _onehot_gather_kernel
        flops = 2 * n2 * n1 * d
        onehot_bytes = block_rows * n1 * itemsize
    else:
        idx_arr = idx0                                            # (n_pad,) SMEM
        idx_spec = pl.BlockSpec((block_rows,), lambda j, i: (i,),
                                memory_space=pltpu.SMEM)
        kernel = functools.partial(_grouped_gather_kernel, n1=n1, group=sublane)
        flops = 0
        onehot_bytes = 0

    x_spec = _maybe_single_buffered((n1, d_tile), lambda j, i: (0, j))
    out_spec = pl.BlockSpec((block_rows, d_tile), lambda j, i: (i, j))

    need = (2 * n1 * d_tile * itemsize            # x slab (2x if Buffered(1) ignored)
            + 2 * block_rows * d_tile * itemsize  # double-buffered output tile
            + onehot_bytes                        # one-hot intermediate
            + (16 << 20))                         # compiler scratch headroom
    vmem_limit = int(min(max(need, 32 << 20), vmem_budget))

    return pl.pallas_call(
        kernel,
        out_shape=jax.ShapeDtypeStruct((n2, d), dtype),
        grid=(d_blocks, n_blocks),
        in_specs=[idx_spec, x_spec],
        out_specs=out_spec,
        compiler_params=pltpu.CompilerParams(
            # Column axis "arbitrary" preserves x-slab reuse ordering; row axis
            # "parallel" lets megacore parts split the row blocks (each core then
            # reads its own copy of the x slab -- reflected in bytes_accessed).
            dimension_semantics=("arbitrary", "parallel"),
            vmem_limit_bytes=vmem_limit,
        ),
        cost_estimate=pl.CostEstimate(
            flops=flops,
            transcendentals=0,
            bytes_accessed=int(2 * n1 * d * itemsize      # x (per-core copy)
                               + n2 * d * itemsize        # output write
                               + n_pad * 4 * d_blocks),   # indices
        ),
        interpret=interpret,
    )(idx_arr, x)


if __name__ == "__main__":
    key = jax.random.PRNGKey(0)
    k_x, k_i, k_x2, k_i2 = jax.random.split(key, 4)

    def reference(x, inds):
        # Pure-JAX closest_pool: concat a shadow zero row, gather column 0.
        x_pad = jnp.concatenate([x, jnp.zeros((1, x.shape[1]), x.dtype)], axis=0)
        return x_pad[inds[:, 0]]

    # --- primary path: one-hot MXU gather (moderate upstream point count) ---
    n1, d = 96, 128            # coarse points, feature dim
    n2, max_num = 1000, 5      # fine points, neighbors per point
    x = jax.random.normal(k_x, (n1, d), dtype=jnp.float32)
    # indices in [0, n1] inclusive: n1 hits the shadow zero row, as in KPConv.
    inds = jax.random.randint(k_i, (n2, max_num), 0, n1 + 1, dtype=jnp.int32)

    out = jax.block_until_ready(nearest_upsample(x, inds))
    ref = reference(x, inds)
    assert out.shape == ref.shape, out.shape
    # Tolerance covers a possible reduced-precision MXU pass for f32 features;
    # a wrong-row gather would be an O(1) error and is still caught.
    assert jnp.allclose(out, ref, rtol=2e-3, atol=2e-3), "one-hot path mismatch"

    # --- fallback path: grouped register-tile gather for large n1 (forced) ---
    # Checked in interpret mode to keep the example light; the hardware path is
    # identical apart from Mosaic lowering of the blocked SMEM index operand.
    n1b, db, n2b = 300, 64, 37
    xb = jax.random.normal(k_x2, (n1b, db), dtype=jnp.float32)
    indsb = jax.random.randint(k_i2, (n2b, 3), 0, n1b + 1, dtype=jnp.int32)
    outb = jax.block_until_ready(
        nearest_upsample(xb, indsb, onehot_max_n1=0, interpret=True))
    refb = reference(xb, indsb)
    assert outb.shape == refb.shape, outb.shape
    assert jnp.allclose(outb, refb), "grouped-gather path mismatch"

    print("KERNEL_OK")
</pallas_src>

<mosaic_0001>
module attributes {stable_mosaic.version = 11 : i64} {
  func.func @_onehot_gather_kernel(%arg0: i32, %arg1: i32, %arg2: memref<128x1xi32, #tpu.memory_space<vmem>>, %arg3: memref<96x128xf32, #tpu.memory_space<vmem>>, %arg4: memref<128x128xf32, #tpu.memory_space<vmem>>) attributes {dimension_semantics = [#tpu.dimension_semantics<arbitrary>, #tpu.dimension_semantics<parallel>], iteration_bounds = array<i64: 1, 8>, scalar_prefetch = 0 : i64, scratch_operands = 0 : i64, tpu.core_type = #tpu.core_type<tc>, window_params = [{transform_indices = @transform_0, window_bounds = array<i64: 128, 1>}, {pipeline_mode = #tpu.pipeline_mode<synchronous>, transform_indices = @transform_1, window_bounds = array<i64: 96, 128>}, {transform_indices = @transform_2, window_bounds = array<i64: 128, 128>}]} {
    %c0 = arith.constant 0 : index
    %c0_0 = arith.constant 0 : index
    %0 = vector.load %arg2[%c0, %c0_0] : memref<128x1xi32, #tpu.memory_space<vmem>>, vector<128x1xi32>
    %1 = tpu.iota {dimensions = array<i32: 1>} : vector<128x96xi32>
    %2 = vector.broadcast %0 : vector<128x1xi32> to vector<128x96xi32>
    %3 = arith.cmpi eq, %1, %2 : vector<128x96xi32>
    %cst = arith.constant 1.000000e+00 : f32
    %cst_1 = arith.constant 0.000000e+00 : f32
    %4 = vector.broadcast %cst : f32 to vector<128x96xf32>
    %5 = vector.broadcast %cst_1 : f32 to vector<128x96xf32>
    %6 = arith.select %3, %4, %5 : vector<128x96xi1>, vector<128x96xf32>
    %c0_2 = arith.constant 0 : index
    %c0_3 = arith.constant 0 : index
    %7 = vector.load %arg3[%c0_2, %c0_3] : memref<96x128xf32, #tpu.memory_space<vmem>>, vector<96x128xf32>
    %cst_4 = arith.constant dense<0.000000e+00> : vector<128x128xf32>
    %8 = tpu.matmul %6, %7, %cst_4 {dimension_numbers = #tpu.dot_dimension_numbers<[1], [0], [0], [1], [0, 0, 1, 1], [], []>} : vector<128x96xf32>, vector<96x128xf32>, vector<128x128xf32> -> vector<128x128xf32>
    %c0_5 = arith.constant 0 : index
    %c0_6 = arith.constant 0 : index
    %9 = vector.load %arg4[%c0_5, %c0_6] : memref<128x128xf32, #tpu.memory_space<vmem>>, vector<128x128xf32>
    tpu.vector_store %arg4[%c0_5, %c0_6], %8 {strides = array<i32>} : memref<128x128xf32, #tpu.memory_space<vmem>>, vector<128x128xf32>,
    return
  }
  func.func @transform_0(%arg0: i32, %arg1: i32) -> (i32, i32) {
    %c0_i32 = arith.constant 0 : i32
    %c0_i32_0 = arith.constant 0 : i32
    return %arg1, %c0_i32 : i32, i32
  }
  func.func @transform_1(%arg0: i32, %arg1: i32) -> (i32, i32) {
    %c0_i32 = arith.constant 0 : i32
    %c0_i32_0 = arith.constant 0 : i32
    return %c0_i32, %arg0 : i32, i32
  }
  func.func @transform_2(%arg0: i32, %arg1: i32) -> (i32, i32) {
    %c0_i32 = arith.constant 0 : i32
    return %arg1, %arg0 : i32, i32
  }
}

</mosaic_0001>

<llo_original>
// kernel: tpu_custom_call.1
$region0: #{tpu_custom_call.1}
  #allocation0 [shape = 'u32[]', space=smem, size = 0x4, offset = 0x4, fixed_abs, tag = 'smem constant byte address 0x4 - core index']
  #allocation1 [shape = 'u32[72,128]{1,0:T(1,128)}', space=vmem, size = 0x9000, scoped, tag = 'internal scratch']
  %s0 = inlined_call_operand.vmem [shape: s32[1024,1], index: 0, kind: input, shape index: {}]
  %s1 = inlined_call_operand.vmem [shape: f32[96,128], index: 1, kind: input, shape index: {}]
  %s2 = inlined_call_operand.hbm [shape: f32[1000,128], index: 2, kind: output, shape index: {}]
  %s3 = sld [smem:[#allocation0]]
  $region41: #{tpu_custom_call.1} parent=0
    _
  %s5 = ssub.s32 1, %s3
  %s6 = scalar_select 0, %s5, %s3
  $region1: #{tpu_custom_call.1} parent=0
    #allocation2 [shape = 'u8[131072]{0}', space=vmem, size = 0x20000, scoped, tag = 'output window, operand 0']
    #allocation3 [shape = 's32[2]{0}', space=sflag, size = 0x8, scoped, tag = 'scoped memory for tpu_custom_call.1']
    %7 = vsyncpa [#allocation3], 0
    %s8 = scalar_lea.sflag [#allocation3], 1
    %9 = vsyncpa %s8, 0
    loop: start=0, step=1, limit=10
    $region2: #{tpu_custom_call.1} parent=1 // loop_pre_header
      _
    $region3: #{tpu_custom_call.1} parent=1 // loop_header
      %s11 = sphi 0, %s15
      %p12 = scmp.ge.s32.totalorder %s11, 10
      %s18 = sphi 0, %s30
      %s19 = sphi 0, %s26
      %s20 = sphi 0, %s18
      %s21 = sphi 0, %s19
      %s22 = sphi 0, %s20
      %s23 = sphi 0, %s21
      %s33 = sphi 0, %s35
      %s36 = sphi 0, %s33
      %s37 = sphi 0, %s36
      %s53 = sphi 0, %s37
      %s59 = sphi 0, %s61
      %s62 = sphi 0, %s59
      %s63 = sphi 0, %s62
      %s79 = sphi 0, %s63
      %s87 = sphi 0, %s89
      %s90 = sphi 0, %s87
      %s91 = sphi 0, %s90
      %s107 = sphi 0, %s91
    $region4: #{tpu_custom_call.1} parent=1 // loop_header_branch
      %14 = sbr.rel (%p12) target = $region8
    $region5: #{tpu_custom_call.1} parent=1 // loop_body
      %s16 = ssub.s32 %s11, 1
      %s17 = ssub.s32 %s11, 2
      %s24 = sadd.s32 1, %s19
      %p25 = scmp.ge.s32.totalorder %s24, 8
      %s26 = scalar_select %p25, 0, %s24
      %s27 = sadd.s32 1, %s18
      %s28 = scalar_select %p25, %s27, %s18
      %p29 = scmp.ge.s32.totalorder %s28, 1
      %s30 = scalar_select %p29, 0, %s28
      %s31 = ssub.s32 %s19, %s26
      %p32 = scmp.eq.s32.totalorder %s31, 0
      %s34 = sadd.s32 %s33, 1
      %s35 = scalar_select %p32, %s33, %s34
      %p38 = pneg %p32
      %p39 = scmp.eq.s32.totalorder %s11, 7
      %p40 = por %p38, %p39
      %p41 = scmp.ne.s32.totalorder %s33, %s36
      %p42 = scmp.eq.s32.totalorder %s11, 0
      %p43 = por %p41, %p42
      %p44 = scmp.ne.s32.totalorder %s33, %s36
      %p45 = scmp.eq.s32.totalorder %s16, 7
      %p46 = por %p44, %p45
      %p47 = scmp.ne.s32.totalorder %s36, %s37
      %p48 = scmp.eq.s32.totalorder %s16, 0
      %p49 = por %p47, %p48
      %p50 = scmp.ne.s32.totalorder %s36, %s37
      %p51 = scmp.eq.s32.totalorder %s17, 7
      %p52 = por %p50, %p51
      %p54 = scmp.ne.s32.totalorder %s37, %s53
      %p55 = scmp.eq.s32.totalorder %s17, 0
      %p56 = por %p54, %p55
      %s57 = ssub.s32 %s18, %s30
      %p58 = scmp.eq.s32.totalorder %s57, 0
      %s60 = sadd.s32 %s59, 1
      %s61 = scalar_select %p58, %s59, %s60
      %p64 = pneg %p58
      %p65 = scmp.eq.s32.totalorder %s11, 7
      %p66 = por %p64, %p65
      %p67 = scmp.ne.s32.totalorder %s59, %s62
      %p68 = scmp.eq.s32.totalorder %s11, 0
      %p69 = por %p67, %p68
      %p70 = scmp.ne.s32.totalorder %s59, %s62
      %p71 = scmp.eq.s32.totalorder %s16, 7
      %p72 = por %p70, %p71
      %p73 = scmp.ne.s32.totalorder %s62, %s63
      %p74 = scmp.eq.s32.totalorder %s16, 0
      %p75 = por %p73, %p74
      %p76 = scmp.ne.s32.totalorder %s62, %s63
      %p77 = scmp.eq.s32.totalorder %s17, 7
      %p78 = por %p76, %p77
      %p80 = scmp.ne.s32.totalorder %s63, %s79
      %p81 = scmp.eq.s32.totalorder %s17, 0
      %p82 = por %p80, %p81
      %s83 = ssub.s32 %s19, %s26
      %s84 = ssub.s32 %s18, %s30
      %s85 = sor.u32 %s83, %s84
      %p86 = scmp.eq.s32.totalorder %s85, 0
      %s88 = sadd.s32 %s87, 1
      %s89 = scalar_select %p86, %s87, %s88
      %p92 = pneg %p86
      %p93 = scmp.eq.s32.totalorder %s11, 7
      %p94 = por %p92, %p93
      %p95 = scmp.ne.s32.totalorder %s87, %s90
      %p96 = scmp.eq.s32.totalorder %s11, 0
      %p97 = por %p95, %p96
      %p98 = scmp.ne.s32.totalorder %s87, %s90
      %p99 = scmp.eq.s32.totalorder %s16, 7
      %p100 = por %p98, %p99
      %p101 = scmp.ne.s32.totalorder %s90, %s91
      %p102 = scmp.eq.s32.totalorder %s16, 0
      %p103 = por %p101, %p102
      %p104 = scmp.ne.s32.totalorder %s90, %s91
      %p105 = scmp.eq.s32.totalorder %s17, 7
      %p106 = por %p104, %p105
      %p108 = scmp.ne.s32.totalorder %s91, %s107
      %p109 = scmp.eq.s32.totalorder %s17, 0
      %p110 = por %p108, %p109
      %p111 = scmp.le.s32.totalorder 1, %s11
      %p112 = scmp.lt.s32.totalorder %s11, 9
      %p113 = pnand %p111, %p112
      %p114 = pneg %p113
      // Predicated region
      $region9: #{tpu_custom_call.1} parent=5 // pred_check
        _
      $region10: #{tpu_custom_call.1} parent=5 // pred_check_branch
        %116 = sbr.rel (%p113) target = $region12
      $region11: #{tpu_custom_call.1} parent=5 // pred_region
        %s117 = ssub.s32 %s11, 1
        // Predicated region
        $region13: #{tpu_custom_call.1} parent=11 // pred_check
          %p118 = pneg %p75
        $region14: #{tpu_custom_call.1} parent=11 // pred_check_branch
          %120 = sbr.rel (%p118) target = $region16
        $region15: #{tpu_custom_call.1} parent=11 // pred_region
          %p121 = scmp.lt.s32.totalorder %s20, 0
          %s122 = scalar_select %p121, %s20, 0
          %s123 = smul.addr %s122, 8
          %s124 = scalar_lea.vmem %s1, %s123
        $region16: #{tpu_custom_call.1} parent=11 // pred_fallthru
          _
      $region12: #{tpu_custom_call.1} parent=5 // pred_fallthru
        _
      %p125 = scmp.lt.s32.totalorder %s11, 8
      // Predicated region
      $region17: #{tpu_custom_call.1} parent=5 // pred_check
        %p126 = pneg %p125
      $region18: #{tpu_custom_call.1} parent=5 // pred_check_branch
        %128 = sbr.rel (%p126) target = $region20
      $region19: #{tpu_custom_call.1} parent=5 // pred_region
        // Predicated region
        $region21: #{tpu_custom_call.1} parent=19 // pred_check
          %p129 = pneg %p43
        $region22: #{tpu_custom_call.1} parent=19 // pred_check_branch
          %131 = sbr.rel (%p129) target = $region24
        $region23: #{tpu_custom_call.1} parent=19 // pred_region
          %s132 = smul.u32 16, %s19
          %p133 = scmp.lt.s32.totalorder %s132, 127
          %s134 = scalar_select %p133, %s132, 127
          %s135 = smul.addr %s134, 8
          %s136 = scalar_lea.vmem %s0, %s135
          %s137 = smul.u32 16, %s19
        $region24: #{tpu_custom_call.1} parent=19 // pred_fallthru
          _
      $region20: #{tpu_custom_call.1} parent=5 // pred_fallthru
        _
      %p138 = scmp.le.s32.totalorder 1, %s11
      %p139 = scmp.lt.s32.totalorder %s11, 9
      %p140 = pnand %p138, %p139
      %p141 = pneg %p140
      // Predicated region
      $region25: #{tpu_custom_call.1} parent=5 // pred_check
        _
      $region26: #{tpu_custom_call.1} parent=5 // pred_check_branch
        %143 = sbr.rel (%p140) target = $region28
      $region27: #{tpu_custom_call.1} parent=5 // pred_region
        %s144 = ssub.s32 %s11, 1
        %s145 = smul.u32 16, %s21
        %p146 = scmp.lt.s32.totalorder %s145, 127
        %s147 = scalar_select %p146, %s145, 127
        %s148 = smul.addr %s147, 8
        %s149 = scalar_lea.vmem %s0, %s148
        %p150 = pneg %p49
        %p151 = pneg %p46
        %p152 = scmp.lt.s32.totalorder %s20, 0
        %s153 = scalar_select %p152, %s20, 0
        %s154 = smul.addr %s153, 8
        %s155 = scalar_lea.vmem %s1, %s154
        %p156 = pneg %p75
        %p157 = pneg %p72
        %p158 = pneg %p103
        %p159 = pneg %p100
        %s160 = sand.u32 %s90, 1
        %s161 = scalar_lea.sflag [#allocation3], %s160
        %s162 = sand.u32 %s90, 1
        %s163 = smul.addr %s162, 128
        %s164 = scalar_lea.vmem [#allocation2], %s163
        %s165 = smul.u32 16, %s21
        %p166 = scmp.lt.s32.totalorder %s165, 127
        %s167 = scalar_select %p166, %s165, 127
        %s168 = smul.addr %s167, 8
        %s169 = scalar_lea.vmem %s0, %s168
        %s170 = smul.u32 16, %s21
        %p171 = scmp.lt.s32.totalorder %s20, 0
        %s172 = scalar_select %p171, %s20, 0
        %s173 = smul.addr %s172, 8
        %s174 = scalar_lea.vmem %s1, %s173
        %s175 = smul.u32 16, %s21
        %s176 = ssub.s32 125, %s175
        %p177 = scmp.lt.s32.totalorder %s176, 16
        %s178 = scalar_select %p177, %s176, 16
        %s179 = smul.u32 8, %s178
        %v180 = vld [vmem:[%s169] sm:$0xff]
        %v181 = vld [vmem:[%s169 + $0x8] sm:$0xff]
        %v182 = vld [vmem:[%s169 + $0x10] sm:$0xff]
        %v183 = vld [vmem:[%s169 + $0x18] sm:$0xff]
        %v184 = vld [vmem:[%s169 + $0x20] sm:$0xff]
        %v185 = vld [vmem:[%s169 + $0x28] sm:$0xff]
        %v186 = vld [vmem:[%s169 + $0x30] sm:$0xff]
        %v187 = vld [vmem:[%s169 + $0x38] sm:$0xff]
        %v188 = vld [vmem:[%s169 + $0x40] sm:$0xff]
        %v189 = vld [vmem:[%s169 + $0x48] sm:$0xff]
        %v190 = vld [vmem:[%s169 + $0x50] sm:$0xff]
        %v191 = vld [vmem:[%s169 + $0x58] sm:$0xff]
        %v192 = vld [vmem:[%s169 + $0x60] sm:$0xff]
        %v193 = vld [vmem:[%s169 + $0x68] sm:$0xff]
        %v194 = vld [vmem:[%s169 + $0x70] sm:$0xff]
        %v195 = vld [vmem:[%s169 + $0x78] sm:$0xff]
        %v196 = vlaneseq
        %v197 = vand.u32 %v196, 127
        %198 = vset.pattern.permute.xlu0 0
        %199 = vperm.xlu0 %198, %v180
        %v200 = vpop.permute.xlu0 %199
        %201 = vset.pattern.permute.xlu0 0
        %202 = vperm.xlu0 %201, %v181
        %v203 = vpop.permute.xlu0 %202
        %204 = vset.pattern.permute.xlu0 0
        %205 = vperm.xlu0 %204, %v182
        %v206 = vpop.permute.xlu0 %205
        %207 = vset.pattern.permute.xlu0 0
        %208 = vperm.xlu0 %207, %v183
        %v209 = vpop.permute.xlu0 %208
        %210 = vset.pattern.permute.xlu0 0
        %211 = vperm.xlu0 %210, %v184
        %v212 = vpop.permute.xlu0 %211
        %213 = vset.pattern.permute.xlu0 0
        %214 = vperm.xlu0 %213, %v185
        %v215 = vpop.permute.xlu0 %214
        %216 = vset.pattern.permute.xlu0 0
        %217 = vperm.xlu0 %216, %v186
        %v218 = vpop.permute.xlu0 %217
        %219 = vset.pattern.permute.xlu0 0
        %220 = vperm.xlu0 %219, %v187
        %v221 = vpop.permute.xlu0 %220
        %222 = vset.pattern.permute.xlu0 0
        %223 = vperm.xlu0 %222, %v188
        %v224 = vpop.permute.xlu0 %223
        %225 = vset.pattern.permute.xlu0 0
        %226 = vperm.xlu0 %225, %v189
        %v227 = vpop.permute.xlu0 %226
        %228 = vset.pattern.permute.xlu0 0
        %229 = vperm.xlu0 %228, %v190
        %v230 = vpop.permute.xlu0 %229
        %231 = vset.pattern.permute.xlu0 0
        %232 = vperm.xlu0 %231, %v191
        %v233 = vpop.permute.xlu0 %232
        %234 = vset.pattern.permute.xlu0 0
        %235 = vperm.xlu0 %234, %v192
        %v236 = vpop.permute.xlu0 %235
        %237 = vset.pattern.permute.xlu0 0
        %238 = vperm.xlu0 %237, %v193
        %v239 = vpop.permute.xlu0 %238
        %240 = vset.pattern.permute.xlu0 0
        %241 = vperm.xlu0 %240, %v194
        %v242 = vpop.permute.xlu0 %241
        %243 = vset.pattern.permute.xlu0 0
        %244 = vperm.xlu0 %243, %v195
        %v245 = vpop.permute.xlu0 %244
        %vm246 = vcmp.eq.s32.totalorder %v197, %v200
        %vm247 = vcmp.eq.s32.totalorder %v197, %v203
        %vm248 = vcmp.eq.s32.totalorder %v197, %v206
        %vm249 = vcmp.eq.s32.totalorder %v197, %v209
        %vm250 = vcmp.eq.s32.totalorder %v197, %v212
        %vm251 = vcmp.eq.s32.totalorder %v197, %v215
        %vm252 = vcmp.eq.s32.totalorder %v197, %v218
        %vm253 = vcmp.eq.s32.totalorder %v197, %v221
        %vm254 = vcmp.eq.s32.totalorder %v197, %v224
        %vm255 = vcmp.eq.s32.totalorder %v197, %v227
        %vm256 = vcmp.eq.s32.totalorder %v197, %v230
        %vm257 = vcmp.eq.s32.totalorder %v197, %v233
        %vm258 = vcmp.eq.s32.totalorder %v197, %v236
        %vm259 = vcmp.eq.s32.totalorder %v197, %v239
        %vm260 = vcmp.eq.s32.totalorder %v197, %v242
        %vm261 = vcmp.eq.s32.totalorder %v197, %v245
        %v262 = vsel %vm246, 1.0, 0.0
        %v263 = vsel %vm247, 1.0, 0.0
        %v264 = vsel %vm248, 1.0, 0.0
        %v265 = vsel %vm249, 1.0, 0.0
        %v266 = vsel %vm250, 1.0, 0.0
        %v267 = vsel %vm251, 1.0, 0.0
        %v268 = vsel %vm252, 1.0, 0.0
        %v269 = vsel %vm253, 1.0, 0.0
        %v270 = vsel %vm254, 1.0, 0.0
        %v271 = vsel %vm255, 1.0, 0.0
        %v272 = vsel %vm256, 1.0, 0.0
        %v273 = vsel %vm257, 1.0, 0.0
        %v274 = vsel %vm258, 1.0, 0.0
        %v275 = vsel %vm259, 1.0, 0.0
        %v276 = vsel %vm260, 1.0, 0.0
        %v277 = vsel %vm261, 1.0, 0.0
        %v278 = vld [vmem:[%s174] sm:$0xff]
        %v279 = vld [vmem:[%s174 + $0x8] sm:$0xff]
        %v280 = vld [vmem:[%s174 + $0x10] sm:$0xff]
        %v281 = vld [vmem:[%s174 + $0x18] sm:$0xff]
        %v282 = vld [vmem:[%s174 + $0x20] sm:$0xff]
        %v283 = vld [vmem:[%s174 + $0x28] sm:$0xff]
        %v284 = vld [vmem:[%s174 + $0x30] sm:$0xff]
        %v285 = vld [vmem:[%s174 + $0x38] sm:$0xff]
        %v286 = vld [vmem:[%s174 + $0x40] sm:$0xff]
        %v287 = vld [vmem:[%s174 + $0x48] sm:$0xff]
        %v288 = vld [vmem:[%s174 + $0x50] sm:$0xff]
        %v289 = vld [vmem:[%s174 + $0x58] sm:$0xff]
        %vm290 = vcmask 785408
        %v292 = vsel %vm290, %v262, 0
        %v295 = vsel %vm290, %v263, 0
        %v298 = vsel %vm290, %v264, 0
        %v301 = vsel %vm290, %v265, 0
        %v304 = vsel %vm290, %v266, 0
        %v307 = vsel %vm290, %v267, 0
        %v310 = vsel %vm290, %v268, 0
        %v313 = vsel %vm290, %v269, 0
        %v316 = vsel %vm290, %v270, 0
        %v319 = vsel %vm290, %v271, 0
        %v322 = vsel %vm290, %v272, 0
        %v325 = vsel %vm290, %v273, 0
        %v328 = vsel %vm290, %v274, 0
        %v331 = vsel %vm290, %v275, 0
        %v334 = vsel %vm290, %v276, 0
        %v337 = vsel %vm290, %v277, 0
        %339 = vmatpush.msra.mxu0 0.0
        %340 = vmatpush.msra.mxu0 0.0
        %341 = vmatpush.msra.mxu0 0.0
        %342 = vmatpush.msra.mxu0 0.0
        %343 = vmatpush.msra.mxu0 %v289
        %344 = vmatpush.msra.mxu0 %v288
        %345 = vmatpush.msra.mxu0 %v287
        %346 = vmatpush.msra.mxu0 %v286
        %347 = vmatpush.msra.mxu0 %v285
        %348 = vmatpush.msra.mxu0 %v284
        %349 = vmatpush.msra.mxu0 %v283
        %350 = vmatpush.msra.mxu0 %v282
        %351 = vmatpush.msra.mxu0 %v281
        %352 = vmatpush.msra.mxu0 %v280
        %353 = vmatpush.msra.mxu0 %v279
        %354 = vmatpush.msra.mxu0 %v278
        %355 = vmatmul.f32.gmra.mxu0 %v292
        %v356 = vpop.f32.mrf.mxu0
        %v357 = vadd.f32 0.0, %v356
        %358 = vmatmul.f32.gmra.mxu0 %v295
        %v359 = vpop.f32.mrf.mxu0
        %v360 = vadd.f32 0.0, %v359
        %361 = vmatmul.f32.gmra.mxu0 %v298
        %v362 = vpop.f32.mrf.mxu0
        %v363 = vadd.f32 0.0, %v362
        %364 = vmatmul.f32.gmra.mxu0 %v301
        %v365 = vpop.f32.mrf.mxu0
        %v366 = vadd.f32 0.0, %v365
        %367 = vmatmul.f32.gmra.mxu0 %v304
        %v368 = vpop.f32.mrf.mxu0
        %v369 = vadd.f32 0.0, %v368
        %370 = vmatmul.f32.gmra.mxu0 %v307
        %v371 = vpop.f32.mrf.mxu0
        %v372 = vadd.f32 0.0, %v371
        %373 = vmatmul.f32.gmra.mxu0 %v310
        %v374 = vpop.f32.mrf.mxu0
        %v375 = vadd.f32 0.0, %v374
        %376 = vmatmul.f32.gmra.mxu0 %v313
        %v377 = vpop.f32.mrf.mxu0
        %v378 = vadd.f32 0.0, %v377
        %379 = vmatmul.f32.gmra.mxu0 %v316
        %v380 = vpop.f32.mrf.mxu0
        %v381 = vadd.f32 0.0, %v380
        %382 = vmatmul.f32.gmra.mxu0 %v319
        %v383 = vpop.f32.mrf.mxu0
        %v384 = vadd.f32 0.0, %v383
        %385 = vmatmul.f32.gmra.mxu0 %v322
        %v386 = vpop.f32.mrf.mxu0
        %v387 = vadd.f32 0.0, %v386
        %388 = vmatmul.f32.gmra.mxu0 %v325
        %v389 = vpop.f32.mrf.mxu0
        %v390 = vadd.f32 0.0, %v389
        %391 = vmatmul.f32.gmra.mxu0 %v328
        %v392 = vpop.f32.mrf.mxu0
        %v393 = vadd.f32 0.0, %v392
        %394 = vmatmul.f32.gmra.mxu0 %v331
        %v395 = vpop.f32.mrf.mxu0
        %v396 = vadd.f32 0.0, %v395
        %397 = vmatmul.f32.gmra.mxu0 %v334
        %v398 = vpop.f32.mrf.mxu0
        %v399 = vadd.f32 0.0, %v398
        %400 = vmatmul.f32.gmra.mxu0 %v337
        %v401 = vpop.f32.mrf.mxu0
        %v402 = vadd.f32 0.0, %v401
        %403 = vdwg.mxu0
        %404 = vst [vmem:[%s164] sm:$0xff] %v357
        %405 = vst [vmem:[%s164 + $0x8] sm:$0xff] %v360
        %406 = vst [vmem:[%s164 + $0x10] sm:$0xff] %v363
        %407 = vst [vmem:[%s164 + $0x18] sm:$0xff] %v366
        %408 = vst [vmem:[%s164 + $0x20] sm:$0xff] %v369
        %409 = vst [vmem:[%s164 + $0x28] sm:$0xff] %v372
        %410 = vst [vmem:[%s164 + $0x30] sm:$0xff] %v375
        %411 = vst [vmem:[%s164 + $0x38] sm:$0xff] %v378
        %412 = vst [vmem:[%s164 + $0x40] sm:$0xff] %v381
        %413 = vst [vmem:[%s164 + $0x48] sm:$0xff] %v384
        %414 = vst [vmem:[%s164 + $0x50] sm:$0xff] %v387
        %415 = vst [vmem:[%s164 + $0x58] sm:$0xff] %v390
        %416 = vst [vmem:[%s164 + $0x60] sm:$0xff] %v393
        %417 = vst [vmem:[%s164 + $0x68] sm:$0xff] %v396
        %418 = vst [vmem:[%s164 + $0x70] sm:$0xff] %v399
        %419 = vst [vmem:[%s164 + $0x78] sm:$0xff] %v402
        %s420 = sand.u32 %s90, 1
        %s421 = scalar_lea.sflag [#allocation3], %s420
        %s422 = sand.u32 %s90, 1
        %s423 = smul.addr %s422, 128
        %s424 = scalar_lea.vmem [#allocation2], %s423
        // Predicated region
        $region29: #{tpu_custom_call.1} parent=27 // pred_check
          %p425 = pneg %p100
        $region30: #{tpu_custom_call.1} parent=27 // pred_check_branch
          %427 = sbr.rel (%p425) target = $region32
        $region31: #{tpu_custom_call.1} parent=27 // pred_region
          %s428 = smul.u32 16, %s21
          %s429 = ssub.s32 125, %s428
          %p430 = scmp.lt.s32.totalorder %s429, 16
          %s431 = scalar_select %p430, %s429, 16
          %s432 = smul.u32 8, %s431
          %s433 = ssub.s32 128, %s432
          %s434 = sshll.u32 %s433, 4
          %435 = vsyncadd %s421, %s434
          %p436 = scmp.ne.s32.totalorder 0, %s432
          %s437 = sadd.s32 %s20, %s428
          %s438 = smul.addr %s437, 8
          %s439 = scalar_lea.hbm %s2, %s438
          %s440 = smul.u32 8, %s431
          %s441 = sshll.u32 %s424, 4
          %s442 = int_to_ptr.vmem [resolvable:$true] %s441
          %s443 = sshll.u32 %s439, 4
          %s444 = int_to_ptr.hbm [resolvable:$true] %s443
          %s445 = sshll.u32 %s440, 4
          %449 = dma.vmem_to_hbm [thread:$0]  (%p436), %s442, %s445, %s444, %s421, 128, 128, 8
        $region32: #{tpu_custom_call.1} parent=27 // pred_fallthru
          _
      $region28: #{tpu_custom_call.1} parent=5 // pred_fallthru
        _
      %p450 = scmp.le.s32.totalorder 2, %s11
      // Predicated region
      $region33: #{tpu_custom_call.1} parent=5 // pred_check
        %p451 = pneg %p450
      $region34: #{tpu_custom_call.1} parent=5 // pred_check_branch
        %453 = sbr.rel (%p451) target = $region36
      $region35: #{tpu_custom_call.1} parent=5 // pred_region
        %s454 = ssub.s32 %s11, 2
        // Predicated region
        $region37: #{tpu_custom_call.1} parent=35 // pred_check
          %p455 = pneg %p106
        $region38: #{tpu_custom_call.1} parent=35 // pred_check_branch
          %457 = sbr.rel (%p455) target = $region40
        $region39: #{tpu_custom_call.1} parent=35 // pred_region
          %s458 = sand.u32 %s91, 1
          %s459 = scalar_lea.sflag [#allocation3], %s458
          %s460 = sand.u32 %s91, 1
          %s461 = smul.addr %s460, 128
          %s462 = scalar_lea.vmem [#allocation2], %s461
          %464 = dma.done %s459, 2048
        $region40: #{tpu_custom_call.1} parent=35 // pred_fallthru
          _
      $region36: #{tpu_custom_call.1} parent=5 // pred_fallthru
        _
    $region6: #{tpu_custom_call.1} parent=1 // loop_footer
      %s15 = sadd.s32 1, %s11
    $region7: #{tpu_custom_call.1} parent=1 // loop_footer_branch
      %10 = sbr.rel target = $region3
    $region8: #{tpu_custom_call.1} parent=1 // loop_exit
      _
    %465 = vsyncpa [#allocation3], 1
    %s466 = scalar_lea.sflag [#allocation3], 1
    %467 = vsyncpa %s466, 1

</llo_original>
